<compile_context>
chip_gen: v6e
topology: v6e:2x2x1
jax: 0.10.0
libtpu: 0.0.40
codegen_flags: <defaults>
</compile_context>

<pallas_src>
import math

import numpy as np
import jax
import jax.numpy as jnp
from jax.experimental import pallas as pl
from jax.experimental.pallas import tpu as pltpu


# --------------------------------------------------------------------------
# Kernel: one fused scale/shift per element.  scale/shift are (1, W) f32 and
# broadcast over the row (sublane) axis.
# --------------------------------------------------------------------------
def _denorm_kernel(scale_ref, shift_ref, x_ref, o_ref):
    x = x_ref[...].astype(jnp.float32)
    o_ref[...] = (x * scale_ref[...] + shift_ref[...]).astype(o_ref.dtype)


def _scale_shift(width, coord, frame_width, frame_height, keep_aspect_ratio):
    """Host-side per-lane scale/shift lookup vectors of shape (1, width).

    Channel of a lane is lane % coord (valid because every kernel row starts
    at a flat offset that is a multiple of `coord`).
    """
    ch = np.arange(width, dtype=np.int64) % coord
    half_w = np.float32(0.5 * frame_width)
    half_h = np.float32(0.5 * frame_height)
    if keep_aspect_ratio:
        # ch0: (x + 1) * fw/2 ; ch1: (x + fh/fw) * fw/2 ; other: x * fw/2
        scale = np.full(width, half_w, dtype=np.float32)
        shift = np.where(ch == 0, half_w,
                         np.where(ch == 1, half_h, np.float32(0.0))).astype(np.float32)
    else:
        # ch0: (x + 1)/2 * fw ; ch1: (x + 1)/2 * fh ; other: x (unchanged)
        scale = np.where(ch == 0, half_w,
                         np.where(ch == 1, half_h, np.float32(1.0))).astype(np.float32)
        shift = np.where(ch == 0, half_w,
                         np.where(ch == 1, half_h, np.float32(0.0))).astype(np.float32)
    return (jnp.asarray(scale.reshape(1, width)),
            jnp.asarray(shift.reshape(1, width)))


def _launch(x2d, scale2d, shift2d, row_tile, *, vmem_limit_bytes, donate_input):
    m, w = x2d.shape
    grid = pl.cdiv(m, row_tile)          # boundary block masked by Pallas
    extra = {}
    if donate_input:
        # Optional: alias x (input index 2) with the output -- halves peak
        # HBM footprint for very large tensors, no effect on traffic.
        extra["input_output_aliases"] = {2: 0}
    return pl.pallas_call(
        _denorm_kernel,
        out_shape=jax.ShapeDtypeStruct((m, w), x2d.dtype),
        grid_spec=pltpu.PrefetchScalarGridSpec(
            num_scalar_prefetch=0,
            grid=(grid,),
            in_specs=[
                pl.BlockSpec((1, w), lambda i: (0, 0)),          # scale (resident)
                pl.BlockSpec((1, w), lambda i: (0, 0)),          # shift (resident)
                pl.BlockSpec((row_tile, w), lambda i: (i, 0)),   # x tile
            ],
            out_specs=pl.BlockSpec((row_tile, w), lambda i: (i, 0)),
        ),
        compiler_params=pltpu.CompilerParams(
            dimension_semantics=("parallel",),
            vmem_limit_bytes=vmem_limit_bytes,
        ),
        **extra,
    )(scale2d, shift2d, x2d)


# --------------------------------------------------------------------------
# Wrapper
# --------------------------------------------------------------------------
def frame_denormalize(tensor, frame_width, frame_height, keep_aspect_ratio=False, *,
                      target_block_bytes=8 * 1024 * 1024,
                      vmem_limit_bytes=48 * 1024 * 1024,
                      donate_input=False):
    """Pallas implementation of FrameDenormalize.forward (dim=-1).

    Component 0 of the last axis maps through frame_width, component 1 through
    frame_height; extra components pass through unchanged (non-aspect) or are
    uniformly scaled by frame_width/2 (aspect).  Returns a new array (JAX is
    functional, so the PyTorch `inline=True` in-place semantics do not apply).
    """
    orig_shape = tensor.shape
    dtype = tensor.dtype
    coord = int(orig_shape[-1])
    n = int(math.prod(orig_shape))
    itemsize = jnp.dtype(dtype).itemsize
    fw = float(frame_width)
    fh = float(frame_height)

    # Lane-dense row width: multiple of 128 lanes and of `coord`; widen by
    # free powers of two while the element count still divides exactly and
    # enough rows remain for a multi-step grid.
    lane_w = 128 * coord // math.gcd(128, coord)
    sub = 8 * max(1, 4 // itemsize)              # sublane multiple for dtype
    while (n % (lane_w * 2) == 0 and lane_w * 2 <= 1024
           and n // (lane_w * 2) >= 4 * sub):
        lane_w *= 2

    def row_tile_for(m):
        rows = max(sub, target_block_bytes // (lane_w * itemsize))
        rows = max(sub, (rows // sub) * sub)     # align down to sublane multiple
        if m <= sub:
            return m                             # single full-dim block
        # Cap so the grid has >= 2 steps (v7x: both TensorCores get work).
        half = -(-m // 2)
        half = -(-half // sub) * sub
        return max(sub, min(rows, half))

    if n >= lane_w and n % lane_w == 0:
        # Exact lane-dense path: pure reshape in/out, single HBM pass.
        m = n // lane_w
        scale, shift = _scale_shift(lane_w, coord, fw, fh, keep_aspect_ratio)
        out = _launch(tensor.reshape(m, lane_w), scale, shift, row_tile_for(m),
                      vmem_limit_bytes=vmem_limit_bytes, donate_input=donate_input)
        return out.reshape(orig_shape)

    flat = tensor.reshape(-1)

    if n >= lane_w:
        # Ragged size: lane-dense bulk through the kernel; the tail
        # (< lane_w elements, channel-aligned since lane_w % coord == 0)
        # finishes with a negligible pure-jnp fma.
        bulk = (n // lane_w) * lane_w
        m = bulk // lane_w
        scale, shift = _scale_shift(lane_w, coord, fw, fh, keep_aspect_ratio)
        bulk_out = _launch(flat[:bulk].reshape(m, lane_w), scale, shift,
                           row_tile_for(m),
                           vmem_limit_bytes=vmem_limit_bytes,
                           donate_input=donate_input)
        t_scale, t_shift = _scale_shift(n - bulk, coord, fw, fh, keep_aspect_ratio)
        tail_out = (flat[bulk:].astype(jnp.float32) * t_scale[0]
                    + t_shift[0]).astype(dtype)
        return jnp.concatenate([bulk_out.reshape(-1), tail_out]).reshape(orig_shape)

    # Tiny input (< one lane-dense row): single full-array block over the
    # natural (rows, coord) view -- still one kernel pass, no padding.
    rows = n // coord
    scale, shift = _scale_shift(coord, coord, fw, fh, keep_aspect_ratio)
    out = _launch(flat.reshape(rows, coord), scale, shift, rows,
                  vmem_limit_bytes=vmem_limit_bytes, donate_input=donate_input)
    return out.reshape(orig_shape)


# --------------------------------------------------------------------------
# Pure-JAX reference mirroring the PyTorch forward.
# --------------------------------------------------------------------------
def _reference(tensor, frame_width, frame_height, keep_aspect_ratio=False):
    t = tensor.astype(jnp.float32)
    if keep_aspect_ratio:
        t = t.at[..., 0].add(1.0)
        t = t.at[..., 1].add(frame_height / frame_width)
        t = t / 2.0 * frame_width
    else:
        t = t.at[..., 0].set((t[..., 0] + 1.0) / 2.0 * frame_width)
        t = t.at[..., 1].set((t[..., 1] + 1.0) / 2.0 * frame_height)
    return t.astype(tensor.dtype)


def _check(name, x, fw, fh, aspect):
    out = frame_denormalize(x, fw, fh, keep_aspect_ratio=aspect)
    jax.block_until_ready(out)
    ref = _reference(x, fw, fh, keep_aspect_ratio=aspect)
    assert out.shape == x.shape and out.dtype == x.dtype, f"shape/dtype: {name}"
    assert jnp.allclose(out, ref, rtol=1e-5, atol=1e-4), f"mismatch: {name}"


if __name__ == "__main__":
    fw, fh = 640.0, 480.0
    key = jax.random.PRNGKey(0)
    k1, k2, k3, k4, k5, k6 = jax.random.split(key, 6)

    # Tiny (batch=2, seq=8, coord=2): full-array single-block path.
    x_tiny = jax.random.uniform(k1, (2, 8, 2), jnp.float32, -1.0, 1.0)
    _check("tiny/no-aspect", x_tiny, fw, fh, False)
    _check("tiny/aspect", x_tiny, fw, fh, True)

    # Exact lane-dense path (n is a multiple of the 128-lane row width).
    x_exact = jax.random.uniform(k2, (2, 64, 2), jnp.float32, -1.0, 1.0)
    _check("exact/no-aspect", x_exact, fw, fh, False)
    _check("exact/aspect", x_exact, fw, fh, True)

    # coord=3: extra pass-through / uniformly-scaled channel.
    x_c3 = jax.random.uniform(k3, (4, 16, 3), jnp.float32, -1.0, 1.0)
    _check("coord3/no-aspect", x_c3, fw, fh, False)
    _check("coord3/aspect", x_c3, fw, fh, True)

    # Ragged element count: lane-dense bulk kernel + tiny jnp tail.
    x_rag = jax.random.uniform(k4, (3, 43, 2), jnp.float32, -1.0, 1.0)
    _check("ragged/no-aspect", x_rag, fw, fh, False)

    # Multi-step grid with a Pallas-masked boundary block (rows=10, tile=8).
    x_bnd = jax.random.uniform(k5, (5, 128, 2), jnp.float32, -1.0, 1.0)
    _check("boundary/aspect", x_bnd, fw, fh, True)

    # Larger shape: >= 2-step parallel grid, widened lane width.
    x_big = jax.random.uniform(k6, (64, 128, 2), jnp.float32, -1.0, 1.0)
    _check("multiblock/aspect", x_big, fw, fh, True)

    print("KERNEL_OK")
</pallas_src>

<mosaic_0001>
module attributes {stable_mosaic.version = 11 : i64} {
  func.func @_denorm_kernel(%arg0: i32, %arg1: memref<1x2xf32, #tpu.memory_space<vmem>>, %arg2: memref<1x2xf32, #tpu.memory_space<vmem>>, %arg3: memref<16x2xf32, #tpu.memory_space<vmem>>, %arg4: memref<16x2xf32, #tpu.memory_space<vmem>>) attributes {dimension_semantics = [#tpu.dimension_semantics<parallel>], iteration_bounds = array<i64: 1>, scalar_prefetch = 0 : i64, scratch_operands = 0 : i64, tpu.core_type = #tpu.core_type<tc>, window_params = [{pipeline_mode = #tpu.pipeline_mode<synchronous>, transform_indices = @transform_0, window_bounds = array<i64: 1, 2>}, {pipeline_mode = #tpu.pipeline_mode<synchronous>, transform_indices = @transform_1, window_bounds = array<i64: 1, 2>}, {transform_indices = @transform_2, window_bounds = array<i64: 16, 2>}, {transform_indices = @transform_3, window_bounds = array<i64: 16, 2>}]} {
    %c0 = arith.constant 0 : index
    %c0_0 = arith.constant 0 : index
    %0 = vector.load %arg3[%c0, %c0_0] : memref<16x2xf32, #tpu.memory_space<vmem>>, vector<16x2xf32>
    %c0_1 = arith.constant 0 : index
    %c0_2 = arith.constant 0 : index
    %1 = vector.load %arg1[%c0_1, %c0_2] : memref<1x2xf32, #tpu.memory_space<vmem>>, vector<1x2xf32>
    %2 = vector.broadcast %1 : vector<1x2xf32> to vector<16x2xf32>
    %3 = arith.mulf %0, %2 : vector<16x2xf32>
    %c0_3 = arith.constant 0 : index
    %c0_4 = arith.constant 0 : index
    %4 = vector.load %arg2[%c0_3, %c0_4] : memref<1x2xf32, #tpu.memory_space<vmem>>, vector<1x2xf32>
    %5 = vector.broadcast %4 : vector<1x2xf32> to vector<16x2xf32>
    %6 = arith.addf %3, %5 : vector<16x2xf32>
    %c0_5 = arith.constant 0 : index
    %c0_6 = arith.constant 0 : index
    %7 = vector.load %arg4[%c0_5, %c0_6] : memref<16x2xf32, #tpu.memory_space<vmem>>, vector<16x2xf32>
    tpu.vector_store %arg4[%c0_5, %c0_6], %6 {strides = array<i32>} : memref<16x2xf32, #tpu.memory_space<vmem>>, vector<16x2xf32>,
    return
  }
  func.func @transform_0(%arg0: i32) -> (i32, i32) {
    %c0_i32 = arith.constant 0 : i32
    %c0_i32_0 = arith.constant 0 : i32
    %c0_i32_1 = arith.constant 0 : i32
    return %c0_i32, %c0_i32_0 : i32, i32
  }
  func.func @transform_1(%arg0: i32) -> (i32, i32) {
    %c0_i32 = arith.constant 0 : i32
    %c0_i32_0 = arith.constant 0 : i32
    %c0_i32_1 = arith.constant 0 : i32
    return %c0_i32, %c0_i32_0 : i32, i32
  }
  func.func @transform_2(%arg0: i32) -> (i32, i32) {
    %c0_i32 = arith.constant 0 : i32
    %c0_i32_0 = arith.constant 0 : i32
    return %arg0, %c0_i32 : i32, i32
  }
  func.func @transform_3(%arg0: i32) -> (i32, i32) {
    %c0_i32 = arith.constant 0 : i32
    %c0_i32_0 = arith.constant 0 : i32
    return %arg0, %c0_i32 : i32, i32
  }
}

</mosaic_0001>

<llo_original>
// kernel: tpu_custom_call.1
$region0: #{tpu_custom_call.1}
  #allocation0 [shape = 'u32[]', space=smem, size = 0x4, offset = 0x4, fixed_abs, tag = 'smem constant byte address 0x4 - core index']
  #allocation1 [shape = 'u32[144,128]{1,0:T(1,128)}', space=vmem, size = 0x12000, scoped, tag = 'internal scratch']
  %s0 = inlined_call_operand.vmem [shape: f32[1,2], index: 0, kind: input, shape index: {}]
  %s1 = inlined_call_operand.vmem [shape: f32[1,2], index: 1, kind: input, shape index: {}]
  %s2 = inlined_call_operand.vmem [shape: f32[16,2], index: 2, kind: input, shape index: {}]
  %s3 = inlined_call_operand.vmem [shape: f32[16,2], index: 3, kind: output, shape index: {}]
  %s4 = sld [smem:[#allocation0]]
  $region22: #{tpu_custom_call.1} parent=0
    _
  %s6 = ssub.s32 1, %s4
  %s7 = scalar_select 0, %s6, %s4
  // Predicated region
  $region2: #{tpu_custom_call.1} parent=0 // pred_check
    _
  $region3: #{tpu_custom_call.1} parent=0 // pred_check_branch
    %9 = sbr.rel (0) target = $region5
  $region4: #{tpu_custom_call.1} parent=0 // pred_region
    _
  $region5: #{tpu_custom_call.1} parent=0 // pred_fallthru
    _
  // Predicated region
  $region6: #{tpu_custom_call.1} parent=0 // pred_check
    _
  $region7: #{tpu_custom_call.1} parent=0 // pred_check_branch
    %11 = sbr.rel (0) target = $region9
  $region8: #{tpu_custom_call.1} parent=0 // pred_region
    _
  $region9: #{tpu_custom_call.1} parent=0 // pred_fallthru
    _
  // Predicated region
  $region10: #{tpu_custom_call.1} parent=0 // pred_check
    _
  $region11: #{tpu_custom_call.1} parent=0 // pred_check_branch
    %13 = sbr.rel (0) target = $region13
  $region12: #{tpu_custom_call.1} parent=0 // pred_region
    _
  $region13: #{tpu_custom_call.1} parent=0 // pred_fallthru
    _
  %v14 = vld [vmem:[%s2] sm:$0xff]
  %v15 = vld [vmem:[%s2 + $0x8] sm:$0xff]
  %v16 = vld [vmem:[%s0] sm:$0x1]
  %v18 = vlaneseq
  %v19 = vshrl.u32 %v18, 7
  %v20 = vsub.s32 0, %v19
  %v21 = vrot.slane %v16, %v20
  %v23 = vmul.f32 %v14, %v21
  %v24 = vmul.f32 %v15, %v21
  %v25 = vld [vmem:[%s1] sm:$0x1]
  %v27 = vlaneseq
  %v28 = vshrl.u32 %v27, 7
  %v29 = vsub.s32 0, %v28
  %v30 = vrot.slane %v25, %v29
  %v32 = vadd.f32 %v23, %v30
  %v33 = vadd.f32 %v24, %v30
  %vm34 = vcmask 15360
  %35 = vst.msk [vmem:[%s3] sm:$0xff] %vm34, %v32
  %36 = vst.msk [vmem:[%s3 + $0x8] sm:$0xff] %vm34, %v33
  // Predicated region
  $region14: #{tpu_custom_call.1} parent=0 // pred_check
    _
  $region15: #{tpu_custom_call.1} parent=0 // pred_check_branch
    %38 = sbr.rel (0) target = $region17
  $region16: #{tpu_custom_call.1} parent=0 // pred_region
    _
  $region17: #{tpu_custom_call.1} parent=0 // pred_fallthru
    _
  // Predicated region
  $region18: #{tpu_custom_call.1} parent=0 // pred_check
    _
  $region19: #{tpu_custom_call.1} parent=0 // pred_check_branch
    %40 = sbr.rel (0) target = $region21
  $region20: #{tpu_custom_call.1} parent=0 // pred_region
    _
  $region21: #{tpu_custom_call.1} parent=0 // pred_fallthru
    _

</llo_original>
